<compile_context>
chip_gen: v7x
topology: tpu7x:2x2x1
jax: 0.10.0
libtpu: 0.0.40
codegen_flags: <defaults>
</compile_context>

<pallas_src>
import jax
import jax.numpy as jnp
import numpy as np
from jax.experimental import pallas as pl
from jax.experimental.pallas import tpu as pltpu

LANE = 128


def _round_up(n: int, m: int) -> int:
    return (n + m - 1) // m * m


# ----------------------------- Pallas kernel ---------------------------------
def _fused_mlp_kernel(x_ref, w1_ref, w2_ref, o_ref):
    # x_ref : (Bt, D_in)   w1_ref : (D_in, H)   w2_ref : (H, C_pad)   o_ref : (Bt, C_pad)
    w1 = w1_ref[...]
    w2 = w2_ref[...]
    x = x_ref[...].astype(w1.dtype)                        # in-kernel cast (no wrapper HBM pass)
    h = jnp.dot(x, w1, preferred_element_type=jnp.float32)  # MXU, f32 accumulate
    # ReLU in the compute dtype: on the bf16 path this halves the (Bt, H)
    # intermediate's vreg/VMEM footprint (v6e/v7x bf16 VPU); mathematically
    # identical to relu-then-cast.  No-op cast on the f32 verification path.
    h = jnp.maximum(h.astype(w2.dtype), 0)
    o = jnp.dot(h, w2, preferred_element_type=jnp.float32)  # MXU, f32 accumulate
    o_ref[...] = o.astype(o_ref.dtype)                      # lane-dense store (C_pad % 128 == 0)


def fused_mlp(x_pad, w1_eff, w2_eff_pad, *, block_b, out_dtype):
    """x_pad: (B_pad, D_in); w1_eff: (D_in, H); w2_eff_pad: (H, C_pad)."""
    B_pad, D_in = x_pad.shape
    H, C_pad = w2_eff_pad.shape
    assert B_pad % block_b == 0 and block_b % 8 == 0 and C_pad % LANE == 0
    grid = (B_pad // block_b,)
    return pl.pallas_call(
        _fused_mlp_kernel,
        out_shape=jax.ShapeDtypeStruct((B_pad, C_pad), out_dtype),
        grid_spec=pl.GridSpec(
            grid=grid,
            in_specs=[
                pl.BlockSpec((block_b, D_in), lambda i: (i, 0)),  # activations stream
                pl.BlockSpec((D_in, H), lambda i: (0, 0)),        # weight resident in VMEM
                pl.BlockSpec((H, C_pad), lambda i: (0, 0)),       # weight resident in VMEM
            ],
            out_specs=pl.BlockSpec((block_b, C_pad), lambda i: (i, 0)),
        ),
        compiler_params=pltpu.CompilerParams(
            # batch axis is independent -> shards across the 2 TensorCores on v7x
            dimension_semantics=("parallel",),
        ),
    )(x_pad, w1_eff, w2_eff_pad)


# --------------------------- parameter preparation ----------------------------
def prepare_params(w1, w2, compute_dtype=jnp.bfloat16, lane=LANE):
    """Fold the differential interleave/deinterleave into the weights (one-time).

    w1 : (H, 2*D_in)  PyTorch nn.Linear layout of model[0]
    w2 : (2*C, H)     PyTorch nn.Linear layout of model[2]
    Returns (w1_eff (D_in,H), w2_eff_pad (H,C_pad), C).  Folding is exact; the
    original positive crossbar weights remain the source of truth for EqProp.
    """
    w1t = w1.T.astype(jnp.float32)                 # (2*D_in, H)
    w2t = w2.T.astype(jnp.float32)                 # (H, 2*C)
    w1_eff = w1t[0::2, :] - w1t[1::2, :]           # (D_in, H)
    w2_eff = w2t[:, 0::2] - w2t[:, 1::2]           # (H, C)
    C = w2_eff.shape[1]
    C_pad = _round_up(max(C, lane), lane)          # lane-dense output stores
    w2_eff_pad = jnp.pad(w2_eff, ((0, 0), (0, C_pad - C)))
    return w1_eff.astype(compute_dtype), w2_eff_pad.astype(compute_dtype), C


def _choose_block_b(b8: int, target: int = 512) -> int:
    """Pick the batch tile (b8 = batch rounded up to the 8-row sublane grain).

    - tiny batch: one tile, zero extra padding.
    - otherwise: ~target rows (amortizes ~0.35us/grid-step + full-rate DMA), but
      never more than half the batch so the grid has >=2 steps and the
      "parallel" axis can use both TensorCores on v7x (no-op on v5e/v6e).
    """
    if b8 <= 64:
        return b8
    half = _round_up((b8 + 1) // 2, 8)
    return min(target, half)


def dummy_analog_ep2_forward(x, w1_eff, w2_eff_pad, num_classes, *,
                             out_dtype=jnp.bfloat16, block_b=None):
    """Full DummyAnalogEP2.forward: one fused pallas_call on folded weights.

    x may be f32 or bf16 (bf16 upstream activations are consumed directly; the
    cast to the compute dtype happens inside the kernel, never in the wrapper).
    """
    B, _ = x.shape
    B8 = _round_up(B, 8)
    if block_b is None:
        block_b = _choose_block_b(B8)
    B_pad = _round_up(B8, block_b)                 # waste kept small by block_b choice
    if B_pad != B:
        x = jnp.pad(x, ((0, B_pad - B), (0, 0)))
    y = fused_mlp(x, w1_eff, w2_eff_pad, block_b=block_b, out_dtype=out_dtype)
    return y[:B, :num_classes]


# ---------------------- reference-only helpers (semantics) --------------------
def interleave_input(x):
    B, D = x.shape
    return jnp.stack([x, -x], axis=-1).reshape(B, 2 * D)


def deinterleave_output(y):
    return y[:, 0::2] - y[:, 1::2]


def positive_init(key, shape, min_w=1e-6, max_w_gain=0.28):
    """Deterministic positive weight init (mimics eqprop positive_param_init)."""
    fan_in = shape[1]
    hi = max_w_gain / float(fan_in)
    return jax.random.uniform(key, shape, dtype=jnp.float32, minval=min_w, maxval=hi)


if __name__ == "__main__":
    # Small shapes consistent with cfg = [D_in*2, H, C*2]
    B, D_in, H, C = 8, 32, 128, 10
    cfg = [2 * D_in, H, 2 * C]

    key = jax.random.PRNGKey(0)
    k_w1, k_w2, k_x, k_x2 = jax.random.split(key, 4)

    # PyTorch nn.Linear weight layout: (out_features, in_features)
    w1 = positive_init(k_w1, (cfg[1], cfg[0]))   # (128, 64)
    w2 = positive_init(k_w2, (cfg[2], cfg[1]))   # (20, 128)
    x = jax.random.normal(k_x, (B, D_in), dtype=jnp.float32)

    hp = jax.lax.Precision.HIGHEST

    # ---- default fast path: bf16 compute, bf16 logits, f32 accumulation -----
    w1_bf, w2_bf, C_out = prepare_params(w1, w2, jnp.bfloat16)
    logits_bf = jax.block_until_ready(dummy_analog_ep2_forward(x, w1_bf, w2_bf, C_out))

    # ---- f32 path, f32 logits: verifies the weight-fold + kernel structure --
    w1_f32, w2_f32, _ = prepare_params(w1, w2, jnp.float32)
    logits_f32 = jax.block_until_ready(
        dummy_analog_ep2_forward(x, w1_f32, w2_f32, C_out, out_dtype=jnp.float32))

    # ---- pure-JAX references -------------------------------------------------
    x_int = interleave_input(x)
    ref_f32 = deinterleave_output(
        jnp.dot(jnp.maximum(jnp.dot(x_int, w1.T, precision=hp), 0.0), w2.T, precision=hp)
    )

    def ref_bf16(xf, w1b, w2b, c):
        # mirrors the kernel's casts exactly (bf16 operands, f32 accumulation)
        h = jnp.dot(xf.astype(jnp.bfloat16), w1b,
                    preferred_element_type=jnp.float32, precision=hp)
        h = jnp.maximum(h.astype(jnp.bfloat16), 0)
        o = jnp.dot(h, w2b, preferred_element_type=jnp.float32, precision=hp)
        return o[:, :c]

    ref_bf = ref_bf16(x, w1_bf, w2_bf, C_out)

    assert logits_bf.shape == (B, C) and logits_bf.dtype == jnp.bfloat16, logits_bf.shape
    assert logits_f32.shape == (B, C), logits_f32.shape
    # Fold + fused kernel correctness (f32 path vs f32 reference of the original module).
    np.testing.assert_allclose(np.asarray(logits_f32), np.asarray(ref_f32),
                               rtol=1e-3, atol=2e-6)
    # bf16 kernel matches a cast-matched bf16 reference tightly ...
    np.testing.assert_allclose(np.asarray(logits_bf, dtype=np.float32),
                               np.asarray(ref_bf.astype(jnp.bfloat16), dtype=np.float32),
                               rtol=2e-2, atol=1e-6)
    # ... and the original f32 semantics within bf16 rounding.
    np.testing.assert_allclose(np.asarray(logits_bf, dtype=np.float32),
                               np.asarray(ref_f32), rtol=0.1, atol=1e-5)

    # ---- larger, awkward batch: exercises the block_b chooser (>=2 grid steps
    # so both v7x TCs are used) and the ragged pad path (300 -> 304 rows, 1.3%).
    B2 = 300
    x2 = jax.random.normal(k_x2, (B2, D_in), dtype=jnp.float32)
    logits2 = jax.block_until_ready(dummy_analog_ep2_forward(x2, w1_bf, w2_bf, C_out))
    ref2 = ref_bf16(x2, w1_bf, w2_bf, C_out)
    assert logits2.shape == (B2, C), logits2.shape
    np.testing.assert_allclose(np.asarray(logits2, dtype=np.float32),
                               np.asarray(ref2.astype(jnp.bfloat16), dtype=np.float32),
                               rtol=2e-2, atol=1e-6)

    print("KERNEL_OK")
</pallas_src>

<mosaic_0001>
module attributes {stable_mosaic.version = 11 : i64} {
  func.func @_fused_mlp_kernel(%arg0: i32, %arg1: memref<8x32xf32, #tpu.memory_space<vmem>>, %arg2: memref<32x128xbf16, #tpu.memory_space<vmem>>, %arg3: memref<128x128xbf16, #tpu.memory_space<vmem>>, %arg4: memref<8x128xbf16, #tpu.memory_space<vmem>>) attributes {dimension_semantics = [#tpu.dimension_semantics<parallel>], iteration_bounds = array<i64: 1>, scalar_prefetch = 0 : i64, scratch_operands = 0 : i64, tpu.core_type = #tpu.core_type<tc>, window_params = [{transform_indices = @transform_0, window_bounds = array<i64: 8, 32>}, {pipeline_mode = #tpu.pipeline_mode<synchronous>, transform_indices = @transform_1, window_bounds = array<i64: 32, 128>}, {pipeline_mode = #tpu.pipeline_mode<synchronous>, transform_indices = @transform_2, window_bounds = array<i64: 128, 128>}, {transform_indices = @transform_3, window_bounds = array<i64: 8, 128>}]} {
    %c0 = arith.constant 0 : index
    %c0_0 = arith.constant 0 : index
    %0 = vector.load %arg2[%c0, %c0_0] : memref<32x128xbf16, #tpu.memory_space<vmem>>, vector<32x128xbf16>
    %c0_1 = arith.constant 0 : index
    %c0_2 = arith.constant 0 : index
    %1 = vector.load %arg3[%c0_1, %c0_2] : memref<128x128xbf16, #tpu.memory_space<vmem>>, vector<128x128xbf16>
    %c0_3 = arith.constant 0 : index
    %c0_4 = arith.constant 0 : index
    %2 = vector.load %arg1[%c0_3, %c0_4] : memref<8x32xf32, #tpu.memory_space<vmem>>, vector<8x32xf32>
    %3 = arith.truncf %2 : vector<8x32xf32> to vector<8x32xbf16>
    %cst = arith.constant dense<0.000000e+00> : vector<8x128xf32>
    %4 = tpu.matmul %3, %0, %cst {dimension_numbers = #tpu.dot_dimension_numbers<[1], [0], [0], [1], [0, 0, 1, 1], [], []>} : vector<8x32xbf16>, vector<32x128xbf16>, vector<8x128xf32> -> vector<8x128xf32>
    %5 = arith.truncf %4 : vector<8x128xf32> to vector<8x128xbf16>
    %cst_5 = arith.constant 0.000000e+00 : bf16
    %6 = vector.broadcast %cst_5 : bf16 to vector<8x128xbf16>
    %7 = arith.maximumf %5, %6 : vector<8x128xbf16>
    %cst_6 = arith.constant dense<0.000000e+00> : vector<8x128xf32>
    %8 = tpu.matmul %7, %1, %cst_6 {dimension_numbers = #tpu.dot_dimension_numbers<[1], [0], [0], [1], [0, 0, 1, 1], [], []>} : vector<8x128xbf16>, vector<128x128xbf16>, vector<8x128xf32> -> vector<8x128xf32>
    %9 = arith.truncf %8 : vector<8x128xf32> to vector<8x128xbf16>
    %c0_7 = arith.constant 0 : index
    %c0_8 = arith.constant 0 : index
    %10 = vector.load %arg4[%c0_7, %c0_8] : memref<8x128xbf16, #tpu.memory_space<vmem>>, vector<8x128xbf16>
    tpu.vector_store %arg4[%c0_7, %c0_8], %9 {strides = array<i32>} : memref<8x128xbf16, #tpu.memory_space<vmem>>, vector<8x128xbf16>,
    return
  }
  func.func @transform_0(%arg0: i32) -> (i32, i32) {
    %c0_i32 = arith.constant 0 : i32
    %c0_i32_0 = arith.constant 0 : i32
    return %arg0, %c0_i32 : i32, i32
  }
  func.func @transform_1(%arg0: i32) -> (i32, i32) {
    %c0_i32 = arith.constant 0 : i32
    %c0_i32_0 = arith.constant 0 : i32
    %c0_i32_1 = arith.constant 0 : i32
    return %c0_i32, %c0_i32_0 : i32, i32
  }
  func.func @transform_2(%arg0: i32) -> (i32, i32) {
    %c0_i32 = arith.constant 0 : i32
    %c0_i32_0 = arith.constant 0 : i32
    %c0_i32_1 = arith.constant 0 : i32
    return %c0_i32, %c0_i32_0 : i32, i32
  }
  func.func @transform_3(%arg0: i32) -> (i32, i32) {
    %c0_i32 = arith.constant 0 : i32
    %c0_i32_0 = arith.constant 0 : i32
    return %arg0, %c0_i32 : i32, i32
  }
}

</mosaic_0001>

<llo_original>
// kernel: tpu_custom_call.1
$region0: #{tpu_custom_call.1}
  #allocation0 [shape = 'u32[]', space=smem, size = 0x4, offset = 0x4, fixed_abs, tag = 'smem constant byte address 0x4 - core index']
  #allocation1 [shape = 'u32[144,128]{1,0:T(1,128)}', space=vmem, size = 0x12000, scoped, tag = 'internal scratch']
  %s0 = inlined_call_operand.hbm [shape: f32[8,32], index: 0, kind: input, shape index: {}]
  %s1 = inlined_call_operand.hbm [shape: bf16[32,128], index: 1, kind: input, shape index: {}]
  %s2 = inlined_call_operand.hbm [shape: bf16[128,128], index: 2, kind: input, shape index: {}]
  %s3 = inlined_call_operand.hbm [shape: bf16[8,128], index: 3, kind: output, shape index: {}]
  %s4 = sld [smem:[#allocation0]]
  $region34: #{tpu_custom_call.1} parent=0
    _
  %s6 = ssub.s32 1, %s4
  %s7 = scalar_select 0, %s6, %s4
  $region1: #{tpu_custom_call.1} parent=0
    #allocation2 [shape = 'u8[4096]{0}', space=vmem, size = 0x1000, scoped, tag = 'input window, operand 0, single buffered']
    #allocation3 [shape = 's32[1]{0}', space=sflag, size = 0x4, scoped, tag = 'scoped memory for tpu_custom_call.1']
    #allocation4 [shape = 's32[1]{0}', space=sflag, size = 0x4, scoped, tag = 'scoped memory for tpu_custom_call.1']
    #allocation5 [shape = 'u8[8192]{0}', space=vmem, size = 0x2000, scoped, tag = 'input window, operand 1, single buffered']
    #allocation6 [shape = 's32[1]{0}', space=sflag, size = 0x4, scoped, tag = 'scoped memory for tpu_custom_call.1']
    #allocation7 [shape = 'u8[32768]{0}', space=vmem, size = 0x8000, scoped, tag = 'input window, operand 2, single buffered']
    #allocation8 [shape = 'u8[2048]{0}', space=vmem, size = 0x800, scoped, tag = 'output window, operand 0, single buffered']
    %8 = vsyncpa [#allocation3], 0
    %9 = vsyncpa [#allocation6], 0
    %10 = vsyncpa [#allocation4], 0
    // Predicated region
    $region2: #{tpu_custom_call.1} parent=1 // pred_check
      _
    $region3: #{tpu_custom_call.1} parent=1 // pred_check_branch
      %12 = sbr.rel (0) target = $region5
    $region4: #{tpu_custom_call.1} parent=1 // pred_region
      %s14 = ssub.s32 128, 128
      %15 = vsyncadd [#allocation3], %s14
      %s17 = sshll.u32 [#allocation2], 4
      %s18 = int_to_ptr.vmem [resolvable:$true] %s17
      %20 = dma.hbm_to_vmem [thread:$0]  %s0, 128, %s18, [#allocation3]
    $region5: #{tpu_custom_call.1} parent=1 // pred_fallthru
      _
    // Predicated region
    $region6: #{tpu_custom_call.1} parent=1 // pred_check
      _
    $region7: #{tpu_custom_call.1} parent=1 // pred_check_branch
      %22 = sbr.rel (0) target = $region9
    $region8: #{tpu_custom_call.1} parent=1 // pred_region
      %s24 = ssub.s32 256, 256
      %25 = vsyncadd [#allocation6], %s24
      %s26 = sshll.u32 [#allocation5], 4
      %s27 = int_to_ptr.vmem [resolvable:$true] %s26
      %32 = dma.hbm_to_vmem [thread:$0]  %s1, 256, %s27, [#allocation6], 64, 64, 4
    $region9: #{tpu_custom_call.1} parent=1 // pred_fallthru
      _
    // Predicated region
    $region10: #{tpu_custom_call.1} parent=1 // pred_check
      _
    $region11: #{tpu_custom_call.1} parent=1 // pred_check_branch
      %34 = sbr.rel (0) target = $region13
    $region12: #{tpu_custom_call.1} parent=1 // pred_region
      %s36 = ssub.s32 1024, 1024
      %37 = vsyncadd [#allocation6], %s36
      %s38 = sshll.u32 [#allocation7], 4
      %s39 = int_to_ptr.vmem [resolvable:$true] %s38
      %44 = dma.hbm_to_vmem [thread:$0]  %s2, 1024, %s39, [#allocation6], 64, 64, 4
    $region13: #{tpu_custom_call.1} parent=1 // pred_fallthru
      _
    // Predicated region
    $region14: #{tpu_custom_call.1} parent=1 // pred_check
      _
    $region15: #{tpu_custom_call.1} parent=1 // pred_check_branch
      %46 = sbr.rel (0) target = $region17
    $region16: #{tpu_custom_call.1} parent=1 // pred_region
      %47 = dma.done [#allocation3], 128
    $region17: #{tpu_custom_call.1} parent=1 // pred_fallthru
      _
    // Predicated region
    $region18: #{tpu_custom_call.1} parent=1 // pred_check
      _
    $region19: #{tpu_custom_call.1} parent=1 // pred_check_branch
      %49 = sbr.rel (0) target = $region21
    $region20: #{tpu_custom_call.1} parent=1 // pred_region
      %50 = dma.done [#allocation6], 256
    $region21: #{tpu_custom_call.1} parent=1 // pred_fallthru
      _
    // Predicated region
    $region22: #{tpu_custom_call.1} parent=1 // pred_check
      _
    $region23: #{tpu_custom_call.1} parent=1 // pred_check_branch
      %52 = sbr.rel (0) target = $region25
    $region24: #{tpu_custom_call.1} parent=1 // pred_region
      %53 = dma.done [#allocation6], 1024
    $region25: #{tpu_custom_call.1} parent=1 // pred_fallthru
      _
    %v55 = vld [vmem:[#allocation5] sm:$0xf]
    %v56 = vld [vmem:[#allocation5 + $0x4] sm:$0xf]
    %v57 = vld [vmem:[#allocation5 + $0x8] sm:$0xf]
    %v58 = vld [vmem:[#allocation5 + $0xc] sm:$0xf]
    %v59 = vld [vmem:[#allocation7] sm:$0xf]
    %v60 = vld [vmem:[#allocation7 + $0x4] sm:$0xf]
    %v61 = vld [vmem:[#allocation7 + $0x8] sm:$0xf]
    %v62 = vld [vmem:[#allocation7 + $0xc] sm:$0xf]
    %v63 = vld [vmem:[#allocation7 + $0x10] sm:$0xf]
    %v64 = vld [vmem:[#allocation7 + $0x14] sm:$0xf]
    %v65 = vld [vmem:[#allocation7 + $0x18] sm:$0xf]
    %v66 = vld [vmem:[#allocation7 + $0x1c] sm:$0xf]
    %v67 = vld [vmem:[#allocation7 + $0x20] sm:$0xf]
    %v68 = vld [vmem:[#allocation7 + $0x24] sm:$0xf]
    %v69 = vld [vmem:[#allocation7 + $0x28] sm:$0xf]
    %v70 = vld [vmem:[#allocation7 + $0x2c] sm:$0xf]
    %v71 = vld [vmem:[#allocation7 + $0x30] sm:$0xf]
    %v72 = vld [vmem:[#allocation7 + $0x34] sm:$0xf]
    %v73 = vld [vmem:[#allocation7 + $0x38] sm:$0xf]
    %v74 = vld [vmem:[#allocation7 + $0x3c] sm:$0xf]
    %v75 = vld [vmem:[#allocation2] sm:$0xff]
    %v76 = vpack.c.bf16 %v75, %v75
    %v81 = vunpack.c.l.b16 %v55
    %v82 = vunpack.c.l.b16 %v56
    %v83 = vunpack.c.l.b16 %v57
    %v84 = vunpack.c.l.b16 %v58
    %v85 = vpack.c.b16 %v82, %v81
    %v86 = vpack.c.b16 %v84, %v83
    %vm89 = vcmask 261120
    %v91 = vsel %vm89, %v76, 0
    %93 = vmatprep.subr.bf16.mxu0 0
    %94 = vmatpush1.bf16.msra.mxu0 %v85
    %95 = vmatprep.subr.bf16.mxu0 0
    %96 = vmatpush1.bf16.msra.mxu0 %v86
    %97 = vmatprep.subr.bf16.mxu0 0
    %98 = vmatpush1.bf16.msra.mxu0 0
    %99 = vmatprep.subr.bf16.mxu0 0
    %100 = vmatpush1.bf16.msra.mxu0 0
    %101 = vmatprep.subr.bf16.mxu0 0
    %102 = vmatpush1.bf16.msra.mxu0 0
    %103 = vmatprep.subr.bf16.mxu0 0
    %104 = vmatpush1.bf16.msra.mxu0 0
    %105 = vmatprep.subr.bf16.mxu0 0
    %106 = vmatpush1.bf16.msra.mxu0 0
    %107 = vmatprep.subr.bf16.mxu0 0
    %108 = vmatpush1.bf16.msra.mxu0 0
    %109 = vmatprep.subr.bf16.mxu0 0
    %110 = vmatpush1.bf16.msra.mxu0 0
    %111 = vmatprep.subr.bf16.mxu0 0
    %112 = vmatpush1.bf16.msra.mxu0 0
    %113 = vmatprep.subr.bf16.mxu0 0
    %114 = vmatpush1.bf16.msra.mxu0 0
    %115 = vmatprep.subr.bf16.mxu0 0
    %116 = vmatpush1.bf16.msra.mxu0 0
    %117 = vmatprep.subr.bf16.mxu0 0
    %118 = vmatpush1.bf16.msra.mxu0 0
    %119 = vmatprep.subr.bf16.mxu0 0
    %120 = vmatpush1.bf16.msra.mxu0 0
    %121 = vmatprep.subr.bf16.mxu0 0
    %122 = vmatpush1.bf16.msra.mxu0 0
    %123 = vmatprep.subr.bf16.mxu0 0
    %124 = vmatpush1.bf16.msra.mxu0 0
    %125 = vmatprep.mubr.bf16.mxu0 0
    %126 = vmatmul.mubr.bf16.gmra.mrb[0].mxu0 %v91
    %v127 = vpop.f32.mrb[0].mxu0
    %v128 = vadd.f32 0.0, %v127
    %v129 = vpop.f32.mrb[0].mxu0
    %v130 = vpop.f32.mrb[0].mxu0
    %v131 = vpop.f32.mrb[0].mxu0
    %132 = vdwg.mxu0
    %v133 = vpack.c.bf16 %v128, %v128
    %v134 = vmax.bf16 %v133, 0
    %v151 = vunpack.c.l.b16 %v59
    %v152 = vunpack.c.l.b16 %v60
    %v153 = vunpack.c.l.b16 %v61
    %v154 = vunpack.c.l.b16 %v62
    %v155 = vunpack.c.l.b16 %v63
    %v156 = vunpack.c.l.b16 %v64
    %v157 = vunpack.c.l.b16 %v65
    %v158 = vunpack.c.l.b16 %v66
    %v159 = vunpack.c.l.b16 %v67
    %v160 = vunpack.c.l.b16 %v68
    %v161 = vunpack.c.l.b16 %v69
    %v162 = vunpack.c.l.b16 %v70
    %v163 = vunpack.c.l.b16 %v71
    %v164 = vunpack.c.l.b16 %v72
    %v165 = vunpack.c.l.b16 %v73
    %v166 = vunpack.c.l.b16 %v74
    %v167 = vpack.c.b16 %v152, %v151
    %v168 = vpack.c.b16 %v154, %v153
    %v169 = vpack.c.b16 %v156, %v155
    %v170 = vpack.c.b16 %v158, %v157
    %v171 = vpack.c.b16 %v160, %v159
    %v172 = vpack.c.b16 %v162, %v161
    %v173 = vpack.c.b16 %v164, %v163
    %v174 = vpack.c.b16 %v166, %v165
    %183 = vmatprep.subr.bf16.mxu0 0
    %184 = vmatpush1.bf16.msra.mxu0 %v167
    %185 = vmatprep.subr.bf16.mxu0 0
    %186 = vmatpush1.bf16.msra.mxu0 %v168
    %187 = vmatprep.subr.bf16.mxu0 0
    %188 = vmatpush1.bf16.msra.mxu0 %v169
    %189 = vmatprep.subr.bf16.mxu0 0
    %190 = vmatpush1.bf16.msra.mxu0 %v170
    %191 = vmatprep.subr.bf16.mxu0 0
    %192 = vmatpush1.bf16.msra.mxu0 %v171
    %193 = vmatprep.subr.bf16.mxu0 0
    %194 = vmatpush1.bf16.msra.mxu0 %v172
    %195 = vmatprep.subr.bf16.mxu0 0
    %196 = vmatpush1.bf16.msra.mxu0 %v173
    %197 = vmatprep.subr.bf16.mxu0 0
    %198 = vmatpush1.bf16.msra.mxu0 %v174
    %199 = vmatprep.subr.bf16.mxu0 0
    %200 = vmatpush1.bf16.msra.mxu0 0
    %201 = vmatprep.subr.bf16.mxu0 0
    %202 = vmatpush1.bf16.msra.mxu0 0
    %203 = vmatprep.subr.bf16.mxu0 0
    %204 = vmatpush1.bf16.msra.mxu0 0
    %205 = vmatprep.subr.bf16.mxu0 0
    %206 = vmatpush1.bf16.msra.mxu0 0
    %207 = vmatprep.subr.bf16.mxu0 0
    %208 = vmatpush1.bf16.msra.mxu0 0
    %209 = vmatprep.subr.bf16.mxu0 0
    %210 = vmatpush1.bf16.msra.mxu0 0
    %211 = vmatprep.subr.bf16.mxu0 0
    %212 = vmatpush1.bf16.msra.mxu0 0
    %213 = vmatprep.subr.bf16.mxu0 0
    %214 = vmatpush1.bf16.msra.mxu0 0
    %215 = vmatprep.mubr.bf16.mxu0 0
    %216 = vmatmul.mubr.bf16.gmra.mrb[0].mxu0 %v134
    %v217 = vpop.f32.mrb[0].mxu0
    %v218 = vadd.f32 0.0, %v217
    %v219 = vpop.f32.mrb[0].mxu0
    %v220 = vpop.f32.mrb[0].mxu0
    %v221 = vpop.f32.mrb[0].mxu0
    %222 = vdwg.mxu0
    %v223 = vpack.c.bf16 %v218, %v218
    %224 = vst [vmem:[#allocation8] sm:$0xf] %v223
    // Predicated region
    $region26: #{tpu_custom_call.1} parent=1 // pred_check
      _
    $region27: #{tpu_custom_call.1} parent=1 // pred_check_branch
      %226 = sbr.rel (0) target = $region29
    $region28: #{tpu_custom_call.1} parent=1 // pred_region
      %s228 = ssub.s32 64, 64
      %229 = vsyncadd [#allocation4], %s228
      %s231 = sshll.u32 [#allocation8], 4
      %s232 = int_to_ptr.vmem [resolvable:$true] %s231
      %234 = dma.vmem_to_hbm [thread:$0]  %s232, 64, %s3, [#allocation4]
    $region29: #{tpu_custom_call.1} parent=1 // pred_fallthru
      _
    // Predicated region
    $region30: #{tpu_custom_call.1} parent=1 // pred_check
      _
    $region31: #{tpu_custom_call.1} parent=1 // pred_check_branch
      %236 = sbr.rel (0) target = $region33
    $region32: #{tpu_custom_call.1} parent=1 // pred_region
      %237 = dma.done [#allocation4], 64
    $region33: #{tpu_custom_call.1} parent=1 // pred_fallthru
      _
    %238 = vsyncpa [#allocation3], 1
    %239 = vsyncpa [#allocation6], 1
    %240 = vsyncpa [#allocation4], 1

</llo_original>
